<compile_context>
chip_gen: v6e
topology: v6e:2x2x1
jax: 0.10.0
libtpu: 0.0.40
codegen_flags: <defaults>
</compile_context>

<pallas_src>
import math

import jax
import jax.numpy as jnp
from jax.experimental import pallas as pl
from jax.experimental.pallas import tpu as pltpu


def _round_up(x, m):
    return ((x + m - 1) // m) * m


def _pick_tm(m, tm_max=512, min_steps=2):
    """Largest row tile (fewest grid steps / least per-step overhead) that still
    leaves >= min_steps grid steps, since v7x shards the "parallel" grid axis
    across its 2 TensorCores."""
    tm = _round_up(max(pl.cdiv(m, min_steps), 16), 16)
    return min(tm, tm_max)


def _token_embed_kernel(x_ref, w_ref, b_ref, o_ref):
    # x_ref: (tm, d_in)    tile of flattened input rows (native K, no padding)
    # w_ref: (d_in, d_out) full weight, VMEM-resident across grid steps
    # b_ref: (1, d_out)    bias, f32
    # o_ref: (tm, d_out)   native N, no padding / no post-call slice
    y = jnp.dot(x_ref[...], w_ref[...], preferred_element_type=jnp.float32)
    o_ref[...] = (y + b_ref[...]).astype(o_ref.dtype)


def token_embedding_forward(x, w, b, *, tm_max=512, min_steps=2):
    """TokenEmbedding forward (norm_layer=None -> Identity):  y = x @ w + b.

    x: (..., input_dim)
    w: (input_dim, embed_dim)   (torch nn.Linear weight, pre-transposed)
    b: (embed_dim,)
    """
    orig_shape = x.shape
    d_in = orig_shape[-1]
    d_out = w.shape[1]
    out_dtype = x.dtype

    x2d = x.reshape(-1, d_in)
    m = x2d.shape[0]

    tm = _pick_tm(m, tm_max=tm_max, min_steps=min_steps)
    m_pad = _round_up(m, tm)
    if m_pad != m:  # only pad rows when needed (avoids an extra HBM pass otherwise)
        x2d = jnp.pad(x2d, ((0, m_pad - m), (0, 0)))

    b2d = b.astype(jnp.float32).reshape(1, d_out)

    grid = (m_pad // tm,)

    in_isz = jnp.dtype(x.dtype).itemsize
    w_isz = jnp.dtype(w.dtype).itemsize
    out_isz = jnp.dtype(out_dtype).itemsize
    # double-buffered x/out tiles + resident (double-buffered) weight + bias
    vmem_est = (2 * tm * d_in * in_isz
                + 2 * tm * d_out * out_isz
                + 2 * d_in * d_out * w_isz
                + 2 * d_out * 4)
    vmem_limit = int(min(max(2 * vmem_est, 32 * 2**20), 48 * 2**20))

    cost = pl.CostEstimate(
        flops=2 * m * d_in * d_out,
        transcendentals=0,
        bytes_accessed=(m * d_in * in_isz + d_in * d_out * w_isz
                        + d_out * 4 + m * d_out * out_isz),
    )

    out = pl.pallas_call(
        _token_embed_kernel,
        out_shape=jax.ShapeDtypeStruct((m_pad, d_out), out_dtype),
        grid_spec=pltpu.PrefetchScalarGridSpec(
            num_scalar_prefetch=0,
            grid=grid,
            in_specs=[
                pl.BlockSpec((tm, d_in), lambda i: (i, 0)),       # x rows tile
                pl.BlockSpec((d_in, d_out), lambda i: (0, 0)),    # resident weight
                pl.BlockSpec((1, d_out), lambda i: (0, 0)),       # resident bias
            ],
            out_specs=pl.BlockSpec((tm, d_out), lambda i: (i, 0)),
        ),
        compiler_params=pltpu.CompilerParams(
            dimension_semantics=("parallel",),
            vmem_limit_bytes=vmem_limit,
        ),
        cost_estimate=cost,
    )(x2d, w, b2d)

    if m_pad != m:
        out = out[:m]
    # TODO(synk): if a non-None norm_layer (e.g. LayerNorm) is used, fuse it into
    # the kernel epilogue; the default PDFormer TokenEmbedding uses nn.Identity.
    return out.reshape(*orig_shape[:-1], d_out)


def _reference(x, w, b):
    d_in = x.shape[-1]
    y = x.reshape(-1, d_in) @ w + b
    return y.reshape(*x.shape[:-1], w.shape[1])


if __name__ == "__main__":
    # PDFormer traffic-style input: (batch, time, nodes, feature_dim)
    B, T, N = 2, 12, 8
    input_dim, embed_dim = 16, 64

    key = jax.random.PRNGKey(0)
    kx, kw, kb = jax.random.split(key, 3)

    x = jax.random.normal(kx, (B, T, N, input_dim), dtype=jnp.float32)

    # nn.Linear init: U(-1/sqrt(fan_in), 1/sqrt(fan_in)); weight stored pre-transposed.
    lim = 1.0 / math.sqrt(input_dim)
    w = jax.random.uniform(kw, (input_dim, embed_dim), jnp.float32, -lim, lim)
    b = jax.random.uniform(kb, (embed_dim,), jnp.float32, -lim, lim)

    ref = _reference(x, w, b)

    out = token_embedding_forward(x, w, b)
    out = jax.block_until_ready(out)
    assert out.shape == (B, T, N, embed_dim)
    assert jnp.allclose(out, ref, atol=1e-5, rtol=1e-5)

    print("KERNEL_OK")
</pallas_src>

<mosaic_0001>
module attributes {stable_mosaic.version = 11 : i64} {
  func.func @_token_embed_kernel(%arg0: i32, %arg1: memref<96x16xf32, #tpu.memory_space<vmem>>, %arg2: memref<16x64xf32, #tpu.memory_space<vmem>>, %arg3: memref<1x64xf32, #tpu.memory_space<vmem>>, %arg4: memref<96x64xf32, #tpu.memory_space<vmem>>) attributes {dimension_semantics = [#tpu.dimension_semantics<parallel>], iteration_bounds = array<i64: 2>, scalar_prefetch = 0 : i64, scratch_operands = 0 : i64, tpu.core_type = #tpu.core_type<tc>, window_params = [{transform_indices = @transform_0, window_bounds = array<i64: 96, 16>}, {pipeline_mode = #tpu.pipeline_mode<synchronous>, transform_indices = @transform_1, window_bounds = array<i64: 16, 64>}, {pipeline_mode = #tpu.pipeline_mode<synchronous>, transform_indices = @transform_2, window_bounds = array<i64: 1, 64>}, {transform_indices = @transform_3, window_bounds = array<i64: 96, 64>}]} {
    %c0 = arith.constant 0 : index
    %c0_0 = arith.constant 0 : index
    %0 = vector.load %arg1[%c0, %c0_0] : memref<96x16xf32, #tpu.memory_space<vmem>>, vector<96x16xf32>
    %c0_1 = arith.constant 0 : index
    %c0_2 = arith.constant 0 : index
    %1 = vector.load %arg2[%c0_1, %c0_2] : memref<16x64xf32, #tpu.memory_space<vmem>>, vector<16x64xf32>
    %cst = arith.constant dense<0.000000e+00> : vector<96x64xf32>
    %2 = tpu.matmul %0, %1, %cst {dimension_numbers = #tpu.dot_dimension_numbers<[1], [0], [0], [1], [0, 0, 1, 1], [], []>} : vector<96x16xf32>, vector<16x64xf32>, vector<96x64xf32> -> vector<96x64xf32>
    %c0_3 = arith.constant 0 : index
    %c0_4 = arith.constant 0 : index
    %3 = vector.load %arg3[%c0_3, %c0_4] : memref<1x64xf32, #tpu.memory_space<vmem>>, vector<1x64xf32>
    %4 = vector.broadcast %3 : vector<1x64xf32> to vector<96x64xf32>
    %5 = arith.addf %2, %4 : vector<96x64xf32>
    %c0_5 = arith.constant 0 : index
    %c0_6 = arith.constant 0 : index
    %6 = vector.load %arg4[%c0_5, %c0_6] : memref<96x64xf32, #tpu.memory_space<vmem>>, vector<96x64xf32>
    tpu.vector_store %arg4[%c0_5, %c0_6], %5 {strides = array<i32>} : memref<96x64xf32, #tpu.memory_space<vmem>>, vector<96x64xf32>,
    return
  }
  func.func @transform_0(%arg0: i32) -> (i32, i32) {
    %c0_i32 = arith.constant 0 : i32
    %c0_i32_0 = arith.constant 0 : i32
    return %arg0, %c0_i32 : i32, i32
  }
  func.func @transform_1(%arg0: i32) -> (i32, i32) {
    %c0_i32 = arith.constant 0 : i32
    %c0_i32_0 = arith.constant 0 : i32
    %c0_i32_1 = arith.constant 0 : i32
    return %c0_i32, %c0_i32_0 : i32, i32
  }
  func.func @transform_2(%arg0: i32) -> (i32, i32) {
    %c0_i32 = arith.constant 0 : i32
    %c0_i32_0 = arith.constant 0 : i32
    %c0_i32_1 = arith.constant 0 : i32
    return %c0_i32, %c0_i32_0 : i32, i32
  }
  func.func @transform_3(%arg0: i32) -> (i32, i32) {
    %c0_i32 = arith.constant 0 : i32
    %c0_i32_0 = arith.constant 0 : i32
    return %arg0, %c0_i32 : i32, i32
  }
}

</mosaic_0001>

<llo_original>
// kernel: tpu_custom_call.1
$region0: #{tpu_custom_call.1}
  #allocation0 [shape = 'u32[]', space=smem, size = 0x4, offset = 0x4, fixed_abs, tag = 'smem constant byte address 0x4 - core index']
  #allocation1 [shape = 'u32[144,128]{1,0:T(1,128)}', space=vmem, size = 0x12000, scoped, tag = 'internal scratch']
  %s0 = inlined_call_operand.vmem [shape: f32[192,16], index: 0, kind: input, shape index: {}]
  %s1 = inlined_call_operand.vmem [shape: f32[16,64], index: 1, kind: input, shape index: {}]
  %s2 = inlined_call_operand.vmem [shape: f32[1,64], index: 2, kind: input, shape index: {}]
  %s3 = inlined_call_operand.vmem [shape: f32[192,64], index: 3, kind: output, shape index: {}]
  %s4 = sld [smem:[#allocation0]]
  $region45: #{tpu_custom_call.1} parent=0
    _
  %s6 = ssub.s32 1, %s4
  %s7 = scalar_select 0, %s6, %s4
  loop: start=0, step=1, limit=4
  $region2: #{tpu_custom_call.1} parent=0 // loop_pre_header
    _
  $region3: #{tpu_custom_call.1} parent=0 // loop_header
    %s9 = sphi 0, %s13
    %p10 = scmp.ge.s32.totalorder %s9, 4
    %s19 = sphi 0, %s21
    %s22 = sphi 0, %s19
    %s23 = sphi 0, %s22
    %s39 = sphi 0, %s23
    %s43 = sphi 0, %s43
    %s45 = sphi 0, %s43
    %s46 = sphi 0, %s45
    %s60 = sphi 0, %s46
    %s64 = sphi 0, %s64
    %s66 = sphi 0, %s64
    %s67 = sphi 0, %s66
    %s81 = sphi 0, %s67
    %s87 = sphi 0, %s89
    %s90 = sphi 0, %s87
    %s91 = sphi 0, %s90
    %s107 = sphi 0, %s91
  $region4: #{tpu_custom_call.1} parent=0 // loop_header_branch
    %12 = sbr.rel (%p10) target = $region8
  $region5: #{tpu_custom_call.1} parent=0 // loop_body
    %s14 = ssub.s32 %s9, 1
    %s15 = ssub.s32 %s9, 2
    %s16 = sadd.s32 %s9, 1
    %s17 = ssub.s32 %s9, %s16
    %p18 = scmp.eq.s32.totalorder %s17, 0
    %s20 = sadd.s32 %s19, 1
    %s21 = scalar_select %p18, %s19, %s20
    %p24 = pneg %p18
    %p25 = scmp.eq.s32.totalorder %s9, 1
    %p26 = por %p24, %p25
    %p27 = scmp.ne.s32.totalorder %s19, %s22
    %p28 = scmp.eq.s32.totalorder %s9, 0
    %p29 = por %p27, %p28
    %p30 = scmp.ne.s32.totalorder %s19, %s22
    %p31 = scmp.eq.s32.totalorder %s14, 1
    %p32 = por %p30, %p31
    %p33 = scmp.ne.s32.totalorder %s22, %s23
    %p34 = scmp.eq.s32.totalorder %s14, 0
    %p35 = por %p33, %p34
    %p36 = scmp.ne.s32.totalorder %s22, %s23
    %p37 = scmp.eq.s32.totalorder %s15, 1
    %p38 = por %p36, %p37
    %p40 = scmp.ne.s32.totalorder %s23, %s39
    %p41 = scmp.eq.s32.totalorder %s15, 0
    %p42 = por %p40, %p41
    %s44 = sadd.s32 %s43, 1
    %p47 = scmp.eq.s32.totalorder %s9, 1
    %p48 = scmp.ne.s32.totalorder %s43, %s45
    %p49 = scmp.eq.s32.totalorder %s9, 0
    %p50 = por %p48, %p49
    %p51 = scmp.ne.s32.totalorder %s43, %s45
    %p52 = scmp.eq.s32.totalorder %s14, 1
    %p53 = por %p51, %p52
    %p54 = scmp.ne.s32.totalorder %s45, %s46
    %p55 = scmp.eq.s32.totalorder %s14, 0
    %p56 = por %p54, %p55
    %p57 = scmp.ne.s32.totalorder %s45, %s46
    %p58 = scmp.eq.s32.totalorder %s15, 1
    %p59 = por %p57, %p58
    %p61 = scmp.ne.s32.totalorder %s46, %s60
    %p62 = scmp.eq.s32.totalorder %s15, 0
    %p63 = por %p61, %p62
    %s65 = sadd.s32 %s64, 1
    %p68 = scmp.eq.s32.totalorder %s9, 1
    %p69 = scmp.ne.s32.totalorder %s64, %s66
    %p70 = scmp.eq.s32.totalorder %s9, 0
    %p71 = por %p69, %p70
    %p72 = scmp.ne.s32.totalorder %s64, %s66
    %p73 = scmp.eq.s32.totalorder %s14, 1
    %p74 = por %p72, %p73
    %p75 = scmp.ne.s32.totalorder %s66, %s67
    %p76 = scmp.eq.s32.totalorder %s14, 0
    %p77 = por %p75, %p76
    %p78 = scmp.ne.s32.totalorder %s66, %s67
    %p79 = scmp.eq.s32.totalorder %s15, 1
    %p80 = por %p78, %p79
    %p82 = scmp.ne.s32.totalorder %s67, %s81
    %p83 = scmp.eq.s32.totalorder %s15, 0
    %p84 = por %p82, %p83
    %s85 = ssub.s32 %s9, %s16
    %p86 = scmp.eq.s32.totalorder %s85, 0
    %s88 = sadd.s32 %s87, 1
    %s89 = scalar_select %p86, %s87, %s88
    %p92 = pneg %p86
    %p93 = scmp.eq.s32.totalorder %s9, 1
    %p94 = por %p92, %p93
    %p95 = scmp.ne.s32.totalorder %s87, %s90
    %p96 = scmp.eq.s32.totalorder %s9, 0
    %p97 = por %p95, %p96
    %p98 = scmp.ne.s32.totalorder %s87, %s90
    %p99 = scmp.eq.s32.totalorder %s14, 1
    %p100 = por %p98, %p99
    %p101 = scmp.ne.s32.totalorder %s90, %s91
    %p102 = scmp.eq.s32.totalorder %s14, 0
    %p103 = por %p101, %p102
    %p104 = scmp.ne.s32.totalorder %s90, %s91
    %p105 = scmp.eq.s32.totalorder %s15, 1
    %p106 = por %p104, %p105
    %p108 = scmp.ne.s32.totalorder %s91, %s107
    %p109 = scmp.eq.s32.totalorder %s15, 0
    %p110 = por %p108, %p109
    %p111 = scmp.le.s32.totalorder 1, %s9
    %p112 = scmp.lt.s32.totalorder %s9, 3
    %p113 = pnand %p111, %p112
    %p114 = pneg %p113
    // Predicated region
    $region9: #{tpu_custom_call.1} parent=5 // pred_check
      _
    $region10: #{tpu_custom_call.1} parent=5 // pred_check_branch
      %116 = sbr.rel (%p113) target = $region12
    $region11: #{tpu_custom_call.1} parent=5 // pred_region
      %s117 = ssub.s32 %s9, 1
      // Predicated region
      $region13: #{tpu_custom_call.1} parent=11 // pred_check
        %p118 = pneg %p56
      $region14: #{tpu_custom_call.1} parent=11 // pred_check_branch
        %120 = sbr.rel (%p118) target = $region16
      $region15: #{tpu_custom_call.1} parent=11 // pred_region
        _
      $region16: #{tpu_custom_call.1} parent=11 // pred_fallthru
        _
      // Predicated region
      $region17: #{tpu_custom_call.1} parent=11 // pred_check
        %p121 = pneg %p77
      $region18: #{tpu_custom_call.1} parent=11 // pred_check_branch
        %123 = sbr.rel (%p121) target = $region20
      $region19: #{tpu_custom_call.1} parent=11 // pred_region
        _
      $region20: #{tpu_custom_call.1} parent=11 // pred_fallthru
        _
    $region12: #{tpu_custom_call.1} parent=5 // pred_fallthru
      _
    %p124 = scmp.lt.s32.totalorder %s9, 2
    // Predicated region
    $region21: #{tpu_custom_call.1} parent=5 // pred_check
      %p125 = pneg %p124
    $region22: #{tpu_custom_call.1} parent=5 // pred_check_branch
      %127 = sbr.rel (%p125) target = $region24
    $region23: #{tpu_custom_call.1} parent=5 // pred_region
      // Predicated region
      $region25: #{tpu_custom_call.1} parent=23 // pred_check
        %p128 = pneg %p29
      $region26: #{tpu_custom_call.1} parent=23 // pred_check_branch
        %130 = sbr.rel (%p128) target = $region28
      $region27: #{tpu_custom_call.1} parent=23 // pred_region
        %s131 = smul.u32 12, %s9
        %p132 = scmp.lt.s32.totalorder %s131, 23
        %s133 = scalar_select %p132, %s131, 23
        %s134 = smul.addr %s133, 8
        %s135 = scalar_lea.vmem %s0, %s134
        %s136 = smul.u32 12, %s9
      $region28: #{tpu_custom_call.1} parent=23 // pred_fallthru
        _
    $region24: #{tpu_custom_call.1} parent=5 // pred_fallthru
      _
    %p137 = scmp.le.s32.totalorder 1, %s9
    %p138 = scmp.lt.s32.totalorder %s9, 3
    %p139 = pnand %p137, %p138
    %p140 = pneg %p139
    // Predicated region
    $region29: #{tpu_custom_call.1} parent=5 // pred_check
      _
    $region30: #{tpu_custom_call.1} parent=5 // pred_check_branch
      %142 = sbr.rel (%p139) target = $region32
    $region31: #{tpu_custom_call.1} parent=5 // pred_region
      %s143 = ssub.s32 %s9, 1
      %s144 = smul.u32 12, %s14
      %p145 = scmp.lt.s32.totalorder %s144, 23
      %s146 = scalar_select %p145, %s144, 23
      %s147 = smul.addr %s146, 8
      %s148 = scalar_lea.vmem %s0, %s147
      %p149 = pneg %p35
      %p150 = pneg %p32
      %p151 = pneg %p56
      %p152 = pneg %p53
      %p153 = pneg %p77
      %p154 = pneg %p74
      %p155 = pneg %p103
      %p156 = pneg %p100
      %s157 = smul.u32 12, %s14
      %p158 = scmp.lt.s32.totalorder %s157, 23
      %s159 = scalar_select %p158, %s157, 23
      %s160 = smul.addr %s159, 8
      %s161 = scalar_lea.vmem %s3, %s160
      %s162 = smul.u32 12, %s14
      %p163 = scmp.lt.s32.totalorder %s162, 23
      %s164 = scalar_select %p163, %s162, 23
      %s165 = smul.addr %s164, 8
      %s166 = scalar_lea.vmem %s0, %s165
      %s167 = smul.u32 12, %s14
      %s168 = smul.u32 12, %s14
      %p169 = scmp.lt.s32.totalorder %s168, 23
      %s170 = scalar_select %p169, %s168, 23
      %s171 = smul.addr %s170, 8
      %s172 = scalar_lea.vmem %s3, %s171
      %s173 = smul.u32 12, %s14
      %v174 = vld [vmem:[%s166] sm:$0xff]
      %v175 = vld [vmem:[%s166 + $0x8] sm:$0xff]
      %v176 = vld [vmem:[%s166 + $0x10] sm:$0xff]
      %v177 = vld [vmem:[%s166 + $0x18] sm:$0xff]
      %v178 = vld [vmem:[%s166 + $0x20] sm:$0xff]
      %v179 = vld [vmem:[%s166 + $0x28] sm:$0xff]
      %v180 = vld [vmem:[%s166 + $0x30] sm:$0xff]
      %v181 = vld [vmem:[%s166 + $0x38] sm:$0xff]
      %v182 = vld [vmem:[%s166 + $0x40] sm:$0xff]
      %v183 = vld [vmem:[%s166 + $0x48] sm:$0xff]
      %v184 = vld [vmem:[%s166 + $0x50] sm:$0xff]
      %v185 = vld [vmem:[%s166 + $0x58] sm:$0xff]
      %v186 = vld [vmem:[%s1] sm:$0xff]
      %v187 = vld [vmem:[%s1 + $0x8] sm:$0xff]
      %v188 = vld [vmem:[%s2] sm:$0x1]
      %v190 = vlaneseq
      %v191 = vshrl.u32 %v190, 7
      %v192 = vsub.s32 0, %v191
      %v193 = vrot.slane %v188, %v192
      %vm195 = vcmask 130048
      %v197 = vsel %vm195, %v174, 0
      %v200 = vsel %vm195, %v175, 0
      %v203 = vsel %vm195, %v176, 0
      %v206 = vsel %vm195, %v177, 0
      %v209 = vsel %vm195, %v178, 0
      %v212 = vsel %vm195, %v179, 0
      %v215 = vsel %vm195, %v180, 0
      %v218 = vsel %vm195, %v181, 0
      %v221 = vsel %vm195, %v182, 0
      %v224 = vsel %vm195, %v183, 0
      %v227 = vsel %vm195, %v184, 0
      %v230 = vsel %vm195, %v185, 0
      %232 = vmatprep.subr.mxu0 0.0
      %233 = vmatpush1.msra.mxu0 0.0
      %234 = vmatprep.subr.mxu0 0.0
      %235 = vmatpush1.msra.mxu0 0.0
      %236 = vmatprep.subr.mxu0 0.0
      %237 = vmatpush1.msra.mxu0 0.0
      %238 = vmatprep.subr.mxu0 0.0
      %239 = vmatpush1.msra.mxu0 0.0
      %240 = vmatprep.subr.mxu0 0.0
      %241 = vmatpush1.msra.mxu0 0.0
      %242 = vmatprep.subr.mxu0 0.0
      %243 = vmatpush1.msra.mxu0 0.0
      %244 = vmatprep.subr.mxu0 0.0
      %245 = vmatpush1.msra.mxu0 0.0
      %246 = vmatprep.subr.mxu0 0.0
      %247 = vmatpush1.msra.mxu0 0.0
      %248 = vmatprep.subr.mxu0 0.0
      %249 = vmatpush1.msra.mxu0 0.0
      %250 = vmatprep.subr.mxu0 0.0
      %251 = vmatpush1.msra.mxu0 0.0
      %252 = vmatprep.subr.mxu0 0.0
      %253 = vmatpush1.msra.mxu0 0.0
      %254 = vmatprep.subr.mxu0 0.0
      %255 = vmatpush1.msra.mxu0 0.0
      %256 = vmatprep.subr.mxu0 0.0
      %257 = vmatpush1.msra.mxu0 0.0
      %258 = vmatprep.subr.mxu0 0.0
      %259 = vmatpush1.msra.mxu0 0.0
      %260 = vmatprep.subr.mxu0 0.0
      %261 = vmatpush1.msra.mxu0 %v187
      %262 = vmatprep.subr.mxu0 0.0
      %263 = vmatpush1.msra.mxu0 %v186
      %264 = vmatprep.subr.mxu0 0.0
      %265 = vmatpush2.msra.mxu0 0.0
      %266 = vmatprep.subr.mxu0 0.0
      %267 = vmatpush2.msra.mxu0 0.0
      %268 = vmatprep.subr.mxu0 0.0
      %269 = vmatpush2.msra.mxu0 0.0
      %270 = vmatprep.subr.mxu0 0.0
      %271 = vmatpush2.msra.mxu0 0.0
      %272 = vmatprep.subr.mxu0 0.0
      %273 = vmatpush2.msra.mxu0 0.0
      %274 = vmatprep.subr.mxu0 0.0
      %275 = vmatpush2.msra.mxu0 0.0
      %276 = vmatprep.subr.mxu0 0.0
      %277 = vmatpush2.msra.mxu0 0.0
      %278 = vmatprep.subr.mxu0 0.0
      %279 = vmatpush2.msra.mxu0 0.0
      %280 = vmatprep.subr.mxu0 0.0
      %281 = vmatpush2.msra.mxu0 0.0
      %282 = vmatprep.subr.mxu0 0.0
      %283 = vmatpush2.msra.mxu0 0.0
      %284 = vmatprep.subr.mxu0 0.0
      %285 = vmatpush2.msra.mxu0 0.0
      %286 = vmatprep.subr.mxu0 0.0
      %287 = vmatpush2.msra.mxu0 0.0
      %288 = vmatprep.subr.mxu0 0.0
      %289 = vmatpush2.msra.mxu0 0.0
      %290 = vmatprep.subr.mxu0 0.0
      %291 = vmatpush2.msra.mxu0 0.0
      %292 = vmatprep.subr.mxu0 0.0
      %293 = vmatpush2.msra.mxu0 0.0
      %294 = vmatprep.subr.mxu0 0.0
      %295 = vmatpush2.msra.mxu0 0.0
      %296 = vmatprep.mubr.f32.mxu0 0.0
      %297 = vmatmul.mubr.f32.gmra.mxu0 %v197
      %v298 = vpop.f32.mrf.mxu0
      %v299 = vadd.f32 %v193, %v298
      %v300 = vpop.f32.mrf.mxu0
      %301 = vmatprep.mubr.f32.mxu0 0.0
      %302 = vmatmul.mubr.f32.gmra.mxu0 %v200
      %v303 = vpop.f32.mrf.mxu0
      %v304 = vadd.f32 %v193, %v303
      %v305 = vpop.f32.mrf.mxu0
      %306 = vmatprep.mubr.f32.mxu0 0.0
      %307 = vmatmul.mubr.f32.gmra.mxu0 %v203
      %v308 = vpop.f32.mrf.mxu0
      %v309 = vadd.f32 %v193, %v308
      %v310 = vpop.f32.mrf.mxu0
      %311 = vmatprep.mubr.f32.mxu0 0.0
      %312 = vmatmul.mubr.f32.gmra.mxu0 %v206
      %v313 = vpop.f32.mrf.mxu0
      %v314 = vadd.f32 %v193, %v313
      %v315 = vpop.f32.mrf.mxu0
      %316 = vmatprep.mubr.f32.mxu0 0.0
      %317 = vmatmul.mubr.f32.gmra.mxu0 %v209
      %v318 = vpop.f32.mrf.mxu0
      %v319 = vadd.f32 %v193, %v318
      %v320 = vpop.f32.mrf.mxu0
      %321 = vmatprep.mubr.f32.mxu0 0.0
      %322 = vmatmul.mubr.f32.gmra.mxu0 %v212
      %v323 = vpop.f32.mrf.mxu0
      %v324 = vadd.f32 %v193, %v323
      %v325 = vpop.f32.mrf.mxu0
      %326 = vmatprep.mubr.f32.mxu0 0.0
      %327 = vmatmul.mubr.f32.gmra.mxu0 %v215
      %v328 = vpop.f32.mrf.mxu0
      %v329 = vadd.f32 %v193, %v328
      %v330 = vpop.f32.mrf.mxu0
      %331 = vmatprep.mubr.f32.mxu0 0.0
      %332 = vmatmul.mubr.f32.gmra.mxu0 %v218
      %v333 = vpop.f32.mrf.mxu0
      %v334 = vadd.f32 %v193, %v333
      %v335 = vpop.f32.mrf.mxu0
      %336 = vmatprep.mubr.f32.mxu0 0.0
      %337 = vmatmul.mubr.f32.gmra.mxu0 %v221
      %v338 = vpop.f32.mrf.mxu0
      %v339 = vadd.f32 %v193, %v338
      %v340 = vpop.f32.mrf.mxu0
      %341 = vmatprep.mubr.f32.mxu0 0.0
      %342 = vmatmul.mubr.f32.gmra.mxu0 %v224
      %v343 = vpop.f32.mrf.mxu0
      %v344 = vadd.f32 %v193, %v343
      %v345 = vpop.f32.mrf.mxu0
      %346 = vmatprep.mubr.f32.mxu0 0.0
      %347 = vmatmul.mubr.f32.gmra.mxu0 %v227
      %v348 = vpop.f32.mrf.mxu0
      %v349 = vadd.f32 %v193, %v348
      %v350 = vpop.f32.mrf.mxu0
      %351 = vmatprep.mubr.f32.mxu0 0.0
      %352 = vmatmul.mubr.f32.gmra.mxu0 %v230
      %v353 = vpop.f32.mrf.mxu0
      %v354 = vadd.f32 %v193, %v353
      %v355 = vpop.f32.mrf.mxu0
      %356 = vdwg.mxu0
      %vm357 = vcmask 523264
      %358 = vst.msk [vmem:[%s172] sm:$0xff] %vm357, %v299
      %359 = vst.msk [vmem:[%s172 + $0x8] sm:$0xff] %vm357, %v304
      %360 = vst.msk [vmem:[%s172 + $0x10] sm:$0xff] %vm357, %v309
      %361 = vst.msk [vmem:[%s172 + $0x18] sm:$0xff] %vm357, %v314
      %362 = vst.msk [vmem:[%s172 + $0x20] sm:$0xff] %vm357, %v319
      %363 = vst.msk [vmem:[%s172 + $0x28] sm:$0xff] %vm357, %v324
      %364 = vst.msk [vmem:[%s172 + $0x30] sm:$0xff] %vm357, %v329
      %365 = vst.msk [vmem:[%s172 + $0x38] sm:$0xff] %vm357, %v334
      %366 = vst.msk [vmem:[%s172 + $0x40] sm:$0xff] %vm357, %v339
      %367 = vst.msk [vmem:[%s172 + $0x48] sm:$0xff] %vm357, %v344
      %368 = vst.msk [vmem:[%s172 + $0x50] sm:$0xff] %vm357, %v349
      %369 = vst.msk [vmem:[%s172 + $0x58] sm:$0xff] %vm357, %v354
      %s370 = smul.u32 12, %s14
      %p371 = scmp.lt.s32.totalorder %s370, 23
      %s372 = scalar_select %p371, %s370, 23
      %s373 = smul.addr %s372, 8
      %s374 = scalar_lea.vmem %s3, %s373
      // Predicated region
      $region33: #{tpu_custom_call.1} parent=31 // pred_check
        %p375 = pneg %p100
      $region34: #{tpu_custom_call.1} parent=31 // pred_check_branch
        %377 = sbr.rel (%p375) target = $region36
      $region35: #{tpu_custom_call.1} parent=31 // pred_region
        %s378 = smul.u32 12, %s14
      $region36: #{tpu_custom_call.1} parent=31 // pred_fallthru
        _
    $region32: #{tpu_custom_call.1} parent=5 // pred_fallthru
      _
    %p379 = scmp.le.s32.totalorder 2, %s9
    // Predicated region
    $region37: #{tpu_custom_call.1} parent=5 // pred_check
      %p380 = pneg %p379
    $region38: #{tpu_custom_call.1} parent=5 // pred_check_branch
      %382 = sbr.rel (%p380) target = $region40
    $region39: #{tpu_custom_call.1} parent=5 // pred_region
      %s383 = ssub.s32 %s9, 2
      // Predicated region
      $region41: #{tpu_custom_call.1} parent=39 // pred_check
        %p384 = pneg %p106
      $region42: #{tpu_custom_call.1} parent=39 // pred_check_branch
        %386 = sbr.rel (%p384) target = $region44
      $region43: #{tpu_custom_call.1} parent=39 // pred_region
        %s387 = smul.u32 12, %s15
        %p388 = scmp.lt.s32.totalorder %s387, 23
        %s389 = scalar_select %p388, %s387, 23
        %s390 = smul.addr %s389, 8
        %s391 = scalar_lea.vmem %s3, %s390
      $region44: #{tpu_custom_call.1} parent=39 // pred_fallthru
        _
    $region40: #{tpu_custom_call.1} parent=5 // pred_fallthru
      _
  $region6: #{tpu_custom_call.1} parent=0 // loop_footer
    %s13 = sadd.s32 1, %s9
  $region7: #{tpu_custom_call.1} parent=0 // loop_footer_branch
    %8 = sbr.rel target = $region3
  $region8: #{tpu_custom_call.1} parent=0 // loop_exit
    _

</llo_original>
